<compile_context>
chip_gen: v5e
topology: v5e:2x2
jax: 0.10.0
libtpu: 0.0.40
codegen_flags: <defaults>
</compile_context>

<pallas_src>
import functools

import jax
import jax.numpy as jnp
import numpy as np
from jax.experimental import pallas as pl
from jax.experimental.pallas import tpu as pltpu

_MIB = 1024 * 1024
_FAST_PATH_MAX_PLANE_BYTES = 2 * _MIB   # one f32 plane small enough to fuse


def _vmem_capacity_bytes():
    """Physical VMEM of the attached TPU; conservative default if unknown."""
    try:
        cap = getattr(pltpu.get_tpu_info(), "vmem_capacity_bytes", None)
        if cap:
            return int(cap)
    except Exception:
        pass
    return 64 * _MIB  # v7x per-core VMEM (smallest across v5e/v6e/v7x)


def _pick_l_block(C, L, tile_budget_bytes):
    """Largest lane tile (multiple of 128) s.t. double-buffered in+out blocks
    (~16 * C * L_blk bytes) fit the per-call tile budget."""
    max_lanes = max(128, (tile_budget_bytes // (16 * C)) // 128 * 128)
    return L if L <= max_lanes else max_lanes


# ----------------------------- kernels --------------------------------------


def _stats_kernel(x_ref, sum_ref, sq_ref, *, L, L_blk):
    # x_ref: (1, C, L_blk); sum_ref / sq_ref: (1, C, 1), resident across tiles.
    t = pl.program_id(1)
    x = x_ref[0]                                               # (C, L_blk)
    lane = jax.lax.broadcasted_iota(jnp.int32, x.shape, 1) + t * L_blk
    x = jnp.where(lane < L, x, 0.0)                            # mask ragged tail
    s = jnp.sum(x, axis=1, keepdims=True)                      # (C, 1)
    sq = jnp.sum(x * x, axis=1, keepdims=True)                 # (C, 1)

    @pl.when(t == 0)
    def _():
        sum_ref[0] = s
        sq_ref[0] = sq

    @pl.when(t > 0)
    def _():
        sum_ref[0] = sum_ref[0] + s
        sq_ref[0] = sq_ref[0] + sq


def _normalize_kernel(x_ref, ss_ref, y_ref):
    # x_ref / y_ref: (1, C, L_blk); ss_ref: (1, 2, C, 1) = per-channel scale/shift.
    x = x_ref[0]
    scale = ss_ref[0, 0]                                       # (C, 1)
    shift = ss_ref[0, 1]                                       # (C, 1)
    y_ref[0] = x * scale + shift                               # one FMA / elem


def _fused_kernel(x_ref, wb_ref, y_ref, *, eps, inv_count):
    # Fast path: one whole plane resident. x_ref/y_ref: (N, C, L); wb: (1,2,C,1)
    x = x_ref[...]
    w = wb_ref[0, 0]                                           # (C, 1)
    b = wb_ref[0, 1]                                           # (C, 1)
    s = jnp.sum(jnp.sum(x, axis=2, keepdims=True), axis=0, keepdims=True)
    mean = s * inv_count                                       # (1, C, 1)
    cen = x - mean
    v = jnp.sum(jnp.sum(cen * cen, axis=2, keepdims=True), axis=0, keepdims=True)
    var = v * inv_count                                        # biased variance
    scale = jax.lax.rsqrt(var + eps) * w                       # (1, C, 1)
    y_ref[...] = cen * scale + b


# ----------------------------- wrapper ---------------------------------------


def naive_complex_batchnorm2d(x, weight_r, bias_r, weight_i, bias_i,
                              eps=1e-5, *, force_tiled=False, l_block=None):
    """x: complex64 (N, C, H, W) -> complex64 (N, C, H, W)."""
    N, C, H, W = x.shape
    L = H * W
    B = 2 * N                       # rows = (plane, batch), plane-major
    elems = B * C * L

    # Split real/imag (one elementwise pass, no transposes) -> (2N, C, L).
    xs = jnp.stack([jnp.real(x), jnp.imag(x)], axis=0).astype(jnp.float32)
    xs = xs.reshape(B, C, L)                                   # free reshape
    w = jnp.stack([weight_r, weight_i]).astype(jnp.float32)    # (2, C)
    b = jnp.stack([bias_r, bias_i]).astype(jnp.float32)        # (2, C)

    cap = _vmem_capacity_bytes()
    vmem_limit = int(max(32 * _MIB, min(cap // 2, 64 * _MIB)))
    plane_bytes = N * C * L * 4

    if (not force_tiled) and plane_bytes <= _FAST_PATH_MAX_PLANE_BYTES:
        # -------- fast path: fused, data read from HBM exactly once --------
        wb = jnp.stack([w, b], axis=1)[..., None]              # (2, 2, C, 1)
        y2 = pl.pallas_call(
            functools.partial(_fused_kernel, eps=eps, inv_count=1.0 / (N * L)),
            grid=(2,),
            in_specs=[
                pl.BlockSpec((N, C, L), lambda p: (p, 0, 0)),
                pl.BlockSpec((1, 2, C, 1), lambda p: (p, 0, 0, 0)),
            ],
            out_specs=pl.BlockSpec((N, C, L), lambda p: (p, 0, 0)),
            out_shape=jax.ShapeDtypeStruct((B, C, L), jnp.float32),
            compiler_params=pltpu.CompilerParams(
                dimension_semantics=("parallel",),
                vmem_limit_bytes=vmem_limit),
            cost_estimate=pl.CostEstimate(
                flops=6 * elems, transcendentals=2 * C,
                bytes_accessed=2 * elems * 4),
        )(xs, wb)
    else:
        # -------- general path: tiled stats pass + tiled normalize pass ----
        tile_budget = max(2 * _MIB, min(cap // 8, 16 * _MIB))
        L_blk = int(l_block) if l_block is not None else _pick_l_block(
            C, L, tile_budget)
        T = pl.cdiv(L, L_blk)

        # Pass 1: per-(plane, batch) channel sums / sums-of-squares.
        sums, sqs = pl.pallas_call(
            functools.partial(_stats_kernel, L=L, L_blk=L_blk),
            grid=(B, T),
            in_specs=[pl.BlockSpec((1, C, L_blk), lambda bb, t: (bb, 0, t))],
            out_specs=(
                pl.BlockSpec((1, C, 1), lambda bb, t: (bb, 0, 0)),
                pl.BlockSpec((1, C, 1), lambda bb, t: (bb, 0, 0)),
            ),
            out_shape=(
                jax.ShapeDtypeStruct((B, C, 1), jnp.float32),
                jax.ShapeDtypeStruct((B, C, 1), jnp.float32),
            ),
            compiler_params=pltpu.CompilerParams(
                dimension_semantics=("parallel", "arbitrary"),
                vmem_limit_bytes=vmem_limit),
            cost_estimate=pl.CostEstimate(
                flops=4 * elems, transcendentals=0,
                bytes_accessed=elems * 4 + 2 * B * C * 4),
        )(xs)

        # Tiny (2, C) finish: fold scale/shift so pass 2 is a single FMA.
        count = jnp.float32(N * L)
        total = sums.reshape(2, N, C).sum(axis=1)              # (2, C)
        total_sq = sqs.reshape(2, N, C).sum(axis=1)            # (2, C)
        mean = total / count
        # TODO(synk): sum/sumsq variance can lose precision for large-|mean|
        # data; fine for BN-scale activations (use Chan's formula otherwise).
        var = jnp.maximum(total_sq / count - mean * mean, 0.0)
        inv = jax.lax.rsqrt(var + eps)
        scale = inv * w
        shift = b - mean * scale
        ss = jnp.stack([scale, shift], axis=1)[..., None]      # (2, 2, C, 1)

        # Pass 2: y = x * scale[c] + shift[c].
        y2 = pl.pallas_call(
            _normalize_kernel,
            grid=(B, T),
            in_specs=[
                pl.BlockSpec((1, C, L_blk), lambda bb, t: (bb, 0, t)),
                pl.BlockSpec((1, 2, C, 1),
                             lambda bb, t, N=N: (bb // N, 0, 0, 0)),
            ],
            out_specs=pl.BlockSpec((1, C, L_blk), lambda bb, t: (bb, 0, t)),
            out_shape=jax.ShapeDtypeStruct((B, C, L), jnp.float32),
            compiler_params=pltpu.CompilerParams(
                dimension_semantics=("parallel", "parallel"),
                vmem_limit_bytes=vmem_limit),
            cost_estimate=pl.CostEstimate(
                flops=2 * elems, transcendentals=0,
                bytes_accessed=2 * elems * 4 + 4 * C * 4),
        )(xs, ss)

    yr = y2[:N].reshape(N, C, H, W)
    yi = y2[N:].reshape(N, C, H, W)
    return jax.lax.complex(yr, yi)


# ----------------------------- reference & test -----------------------------


def _reference(x, weight_r, bias_r, weight_i, bias_i, eps=1e-5):
    def bn(p, w, b):
        mean = jnp.mean(p, axis=(0, 2, 3), keepdims=True)
        var = jnp.mean((p - mean) ** 2, axis=(0, 2, 3), keepdims=True)
        return (p - mean) / jnp.sqrt(var + eps) * w.reshape(1, -1, 1, 1) \
            + b.reshape(1, -1, 1, 1)
    yr = bn(jnp.real(x).astype(jnp.float32), weight_r, bias_r)
    yi = bn(jnp.imag(x).astype(jnp.float32), weight_i, bias_i)
    return jax.lax.complex(yr, yi)


if __name__ == "__main__":
    key = jax.random.PRNGKey(0)
    k1, k2, k3, k4, k5, k6 = jax.random.split(key, 6)

    N, C, H, W = 2, 4, 16, 16
    x = jax.lax.complex(jax.random.normal(k1, (N, C, H, W), jnp.float32),
                        jax.random.normal(k2, (N, C, H, W), jnp.float32))
    weight_r = 1.0 + 0.1 * jax.random.normal(k3, (C,), jnp.float32)
    bias_r = 0.1 * jax.random.normal(k4, (C,), jnp.float32)
    weight_i = 1.0 + 0.1 * jax.random.normal(k5, (C,), jnp.float32)
    bias_i = 0.1 * jax.random.normal(k6, (C,), jnp.float32)

    ref = _reference(x, weight_r, bias_r, weight_i, bias_i)

    # 1) fast (fused, single-read) path.
    out = jax.block_until_ready(
        naive_complex_batchnorm2d(x, weight_r, bias_r, weight_i, bias_i))
    assert out.shape == (N, C, H, W) and out.dtype == jnp.complex64
    np.testing.assert_allclose(np.asarray(out), np.asarray(ref),
                               rtol=1e-5, atol=1e-5)

    # 2) tiled two-pass path (forced, two lane tiles -> exercises accumulation).
    out_t = jax.block_until_ready(
        naive_complex_batchnorm2d(x, weight_r, bias_r, weight_i, bias_i,
                                  force_tiled=True, l_block=128))
    np.testing.assert_allclose(np.asarray(out_t), np.asarray(ref),
                               rtol=1e-5, atol=1e-5)

    # 3) tiled path with a ragged last lane tile (exercises the masking path).
    N2, C2, H2, W2 = 2, 3, 6, 22            # L = 132 -> tiles 128 + ragged 4
    kk = jax.random.split(jax.random.PRNGKey(1), 6)
    x2 = jax.lax.complex(jax.random.normal(kk[0], (N2, C2, H2, W2), jnp.float32),
                         jax.random.normal(kk[1], (N2, C2, H2, W2), jnp.float32))
    w_r2 = 1.0 + 0.1 * jax.random.normal(kk[2], (C2,), jnp.float32)
    b_r2 = 0.1 * jax.random.normal(kk[3], (C2,), jnp.float32)
    w_i2 = 1.0 + 0.1 * jax.random.normal(kk[4], (C2,), jnp.float32)
    b_i2 = 0.1 * jax.random.normal(kk[5], (C2,), jnp.float32)
    out2 = jax.block_until_ready(
        naive_complex_batchnorm2d(x2, w_r2, b_r2, w_i2, b_i2,
                                  force_tiled=True, l_block=128))
    ref2 = _reference(x2, w_r2, b_r2, w_i2, b_i2)
    np.testing.assert_allclose(np.asarray(out2), np.asarray(ref2),
                               rtol=1e-5, atol=1e-5)

    print("KERNEL_OK")
</pallas_src>

<mosaic_0001>
module attributes {stable_mosaic.version = 11 : i64} {
  func.func @_fused_kernel(%arg0: i32, %arg1: memref<2x4x256xf32, #tpu.memory_space<vmem>>, %arg2: memref<1x2x4x1xf32, #tpu.memory_space<vmem>>, %arg3: memref<2x4x256xf32, #tpu.memory_space<vmem>>) attributes {dimension_semantics = [#tpu.dimension_semantics<parallel>], iteration_bounds = array<i64: 2>, scalar_prefetch = 0 : i64, scratch_operands = 0 : i64, tpu.core_type = #tpu.core_type<tc>, window_params = [{transform_indices = @transform_0, window_bounds = array<i64: 2, 4, 256>}, {transform_indices = @transform_1, window_bounds = array<i64: 1, 2, 4, 1>}, {transform_indices = @transform_2, window_bounds = array<i64: 2, 4, 256>}]} {
    %c0 = arith.constant 0 : index
    %c0_0 = arith.constant 0 : index
    %c0_1 = arith.constant 0 : index
    %0 = vector.load %arg1[%c0, %c0_0, %c0_1] : memref<2x4x256xf32, #tpu.memory_space<vmem>>, vector<2x4x256xf32>
    %c0_2 = arith.constant 0 : index
    %c0_3 = arith.constant 0 : index
    %c0_4 = arith.constant 0 : index
    %c0_5 = arith.constant 0 : index
    %1 = vector.load %arg2[%c0_2, %c0_3, %c0_4, %c0_5] : memref<1x2x4x1xf32, #tpu.memory_space<vmem>>, vector<1x1x4x1xf32>
    %2 = vector.shape_cast %1 : vector<1x1x4x1xf32> to vector<4x1xf32>
    %c0_6 = arith.constant 0 : index
    %c1 = arith.constant 1 : index
    %c0_7 = arith.constant 0 : index
    %c0_8 = arith.constant 0 : index
    %3 = vector.load %arg2[%c0_6, %c1, %c0_7, %c0_8] : memref<1x2x4x1xf32, #tpu.memory_space<vmem>>, vector<1x1x4x1xf32>
    %4 = vector.shape_cast %3 : vector<1x1x4x1xf32> to vector<4x1xf32>
    %cst = arith.constant dense<0.000000e+00> : vector<2x4xf32>
    %5 = vector.multi_reduction <add>, %0, %cst [2] : vector<2x4x256xf32> to vector<2x4xf32>
    %6 = vector.shape_cast %5 : vector<2x4xf32> to vector<2x4x1xf32>
    %cst_9 = arith.constant dense<0.000000e+00> : vector<4x1xf32>
    %7 = vector.multi_reduction <add>, %6, %cst_9 [0] : vector<2x4x1xf32> to vector<4x1xf32>
    %8 = vector.shape_cast %7 : vector<4x1xf32> to vector<1x4x1xf32>
    %cst_10 = arith.constant 0.001953125 : f32
    %9 = vector.broadcast %cst_10 : f32 to vector<1x4x1xf32>
    %10 = arith.mulf %8, %9 : vector<1x4x1xf32>
    %11 = vector.broadcast %10 : vector<1x4x1xf32> to vector<2x4x256xf32>
    %12 = arith.subf %0, %11 : vector<2x4x256xf32>
    %13 = arith.mulf %12, %12 : vector<2x4x256xf32>
    %cst_11 = arith.constant dense<0.000000e+00> : vector<2x4xf32>
    %14 = vector.multi_reduction <add>, %13, %cst_11 [2] : vector<2x4x256xf32> to vector<2x4xf32>
    %15 = vector.shape_cast %14 : vector<2x4xf32> to vector<2x4x1xf32>
    %cst_12 = arith.constant dense<0.000000e+00> : vector<4x1xf32>
    %16 = vector.multi_reduction <add>, %15, %cst_12 [0] : vector<2x4x1xf32> to vector<4x1xf32>
    %17 = vector.shape_cast %16 : vector<4x1xf32> to vector<1x4x1xf32>
    %cst_13 = arith.constant 0.001953125 : f32
    %18 = vector.broadcast %cst_13 : f32 to vector<1x4x1xf32>
    %19 = arith.mulf %17, %18 : vector<1x4x1xf32>
    %cst_14 = arith.constant 9.99999974E-6 : f32
    %20 = vector.broadcast %cst_14 : f32 to vector<1x4x1xf32>
    %21 = arith.addf %19, %20 : vector<1x4x1xf32>
    %22 = math.rsqrt %21 : vector<1x4x1xf32>
    %23 = vector.shape_cast %2 : vector<4x1xf32> to vector<1x4x1xf32>
    %24 = arith.mulf %22, %23 : vector<1x4x1xf32>
    %25 = vector.broadcast %24 : vector<1x4x1xf32> to vector<2x4x256xf32>
    %26 = arith.mulf %12, %25 : vector<2x4x256xf32>
    %27 = vector.shape_cast %4 : vector<4x1xf32> to vector<1x4x1xf32>
    %28 = vector.broadcast %27 : vector<1x4x1xf32> to vector<2x4x256xf32>
    %29 = arith.addf %26, %28 : vector<2x4x256xf32>
    %c0_15 = arith.constant 0 : index
    %c0_16 = arith.constant 0 : index
    %c0_17 = arith.constant 0 : index
    %30 = vector.load %arg3[%c0_15, %c0_16, %c0_17] : memref<2x4x256xf32, #tpu.memory_space<vmem>>, vector<2x4x256xf32>
    tpu.vector_store %arg3[%c0_15, %c0_16, %c0_17], %29 {strides = array<i32>} : memref<2x4x256xf32, #tpu.memory_space<vmem>>, vector<2x4x256xf32>,
    return
  }
  func.func @transform_0(%arg0: i32) -> (i32, i32, i32) {
    %c0_i32 = arith.constant 0 : i32
    %c0_i32_0 = arith.constant 0 : i32
    %c0_i32_1 = arith.constant 0 : i32
    return %arg0, %c0_i32, %c0_i32_0 : i32, i32, i32
  }
  func.func @transform_1(%arg0: i32) -> (i32, i32, i32, i32) {
    %c0_i32 = arith.constant 0 : i32
    %c0_i32_0 = arith.constant 0 : i32
    %c0_i32_1 = arith.constant 0 : i32
    %c0_i32_2 = arith.constant 0 : i32
    return %arg0, %c0_i32, %c0_i32_0, %c0_i32_1 : i32, i32, i32, i32
  }
  func.func @transform_2(%arg0: i32) -> (i32, i32, i32) {
    %c0_i32 = arith.constant 0 : i32
    %c0_i32_0 = arith.constant 0 : i32
    %c0_i32_1 = arith.constant 0 : i32
    return %arg0, %c0_i32, %c0_i32_0 : i32, i32, i32
  }
}

</mosaic_0001>

<llo_original>
// kernel: tpu_custom_call.1
$region0: #{tpu_custom_call.1}
  #allocation0 [shape = 'u32[]', space=smem, size = 0x4, offset = 0x4, fixed_abs, tag = 'smem constant byte address 0x4 - core index']
  #allocation1 [shape = 'u32[72,128]{1,0:T(1,128)}', space=vmem, size = 0x9000, scoped, tag = 'internal scratch']
  %s0 = inlined_call_operand.hbm [shape: f32[4,4,256], index: 0, kind: input, shape index: {}]
  %s1 = inlined_call_operand.vmem [shape: f32[2,2,4,1], index: 1, kind: input, shape index: {}]
  %s2 = inlined_call_operand.hbm [shape: f32[4,4,256], index: 2, kind: output, shape index: {}]
  %s3 = sld [smem:[#allocation0]]
  $region45: #{tpu_custom_call.1} parent=0
    _
  %s5 = ssub.s32 1, %s3
  %s6 = scalar_select 0, %s5, %s3
  $region1: #{tpu_custom_call.1} parent=0
    #allocation2 [shape = 'u8[16384]{0}', space=vmem, size = 0x4000, scoped, tag = 'input window, operand 0']
    #allocation3 [shape = 's32[2]{0}', space=sflag, size = 0x8, scoped, tag = 'scoped memory for tpu_custom_call.1']
    #allocation4 [shape = 's32[2]{0}', space=sflag, size = 0x8, scoped, tag = 'scoped memory for tpu_custom_call.1']
    #allocation5 [shape = 'u8[16384]{0}', space=vmem, size = 0x4000, scoped, tag = 'output window, operand 0']
    %7 = vsyncpa [#allocation3], 0
    %s8 = scalar_lea.sflag [#allocation3], 1
    %9 = vsyncpa %s8, 0
    %10 = vsyncpa [#allocation4], 0
    %s11 = scalar_lea.sflag [#allocation4], 1
    %12 = vsyncpa %s11, 0
    loop: start=0, step=1, limit=4
    $region2: #{tpu_custom_call.1} parent=1 // loop_pre_header
      _
    $region3: #{tpu_custom_call.1} parent=1 // loop_header
      %s14 = sphi 0, %s18
      %p15 = scmp.ge.s32.totalorder %s14, 4
      %s24 = sphi 0, %s26
      %s27 = sphi 0, %s24
      %s28 = sphi 0, %s27
      %s44 = sphi 0, %s28
      %s50 = sphi 0, %s52
      %s53 = sphi 0, %s50
      %s54 = sphi 0, %s53
      %s70 = sphi 0, %s54
      %s76 = sphi 0, %s78
      %s79 = sphi 0, %s76
      %s80 = sphi 0, %s79
      %s96 = sphi 0, %s80
    $region4: #{tpu_custom_call.1} parent=1 // loop_header_branch
      %17 = sbr.rel (%p15) target = $region8
    $region5: #{tpu_custom_call.1} parent=1 // loop_body
      %s19 = ssub.s32 %s14, 1
      %s20 = ssub.s32 %s14, 2
      %s21 = sadd.s32 %s14, 1
      %s22 = ssub.s32 %s14, %s21
      %p23 = scmp.eq.s32.totalorder %s22, 0
      %s25 = sadd.s32 %s24, 1
      %s26 = scalar_select %p23, %s24, %s25
      %p29 = pneg %p23
      %p30 = scmp.eq.s32.totalorder %s14, 1
      %p31 = por %p29, %p30
      %p32 = scmp.ne.s32.totalorder %s24, %s27
      %p33 = scmp.eq.s32.totalorder %s14, 0
      %p34 = por %p32, %p33
      %p35 = scmp.ne.s32.totalorder %s24, %s27
      %p36 = scmp.eq.s32.totalorder %s19, 1
      %p37 = por %p35, %p36
      %p38 = scmp.ne.s32.totalorder %s27, %s28
      %p39 = scmp.eq.s32.totalorder %s19, 0
      %p40 = por %p38, %p39
      %p41 = scmp.ne.s32.totalorder %s27, %s28
      %p42 = scmp.eq.s32.totalorder %s20, 1
      %p43 = por %p41, %p42
      %p45 = scmp.ne.s32.totalorder %s28, %s44
      %p46 = scmp.eq.s32.totalorder %s20, 0
      %p47 = por %p45, %p46
      %s48 = ssub.s32 %s14, %s21
      %p49 = scmp.eq.s32.totalorder %s48, 0
      %s51 = sadd.s32 %s50, 1
      %s52 = scalar_select %p49, %s50, %s51
      %p55 = pneg %p49
      %p56 = scmp.eq.s32.totalorder %s14, 1
      %p57 = por %p55, %p56
      %p58 = scmp.ne.s32.totalorder %s50, %s53
      %p59 = scmp.eq.s32.totalorder %s14, 0
      %p60 = por %p58, %p59
      %p61 = scmp.ne.s32.totalorder %s50, %s53
      %p62 = scmp.eq.s32.totalorder %s19, 1
      %p63 = por %p61, %p62
      %p64 = scmp.ne.s32.totalorder %s53, %s54
      %p65 = scmp.eq.s32.totalorder %s19, 0
      %p66 = por %p64, %p65
      %p67 = scmp.ne.s32.totalorder %s53, %s54
      %p68 = scmp.eq.s32.totalorder %s20, 1
      %p69 = por %p67, %p68
      %p71 = scmp.ne.s32.totalorder %s54, %s70
      %p72 = scmp.eq.s32.totalorder %s20, 0
      %p73 = por %p71, %p72
      %s74 = ssub.s32 %s14, %s21
      %p75 = scmp.eq.s32.totalorder %s74, 0
      %s77 = sadd.s32 %s76, 1
      %s78 = scalar_select %p75, %s76, %s77
      %p81 = pneg %p75
      %p82 = scmp.eq.s32.totalorder %s14, 1
      %p83 = por %p81, %p82
      %p84 = scmp.ne.s32.totalorder %s76, %s79
      %p85 = scmp.eq.s32.totalorder %s14, 0
      %p86 = por %p84, %p85
      %p87 = scmp.ne.s32.totalorder %s76, %s79
      %p88 = scmp.eq.s32.totalorder %s19, 1
      %p89 = por %p87, %p88
      %p90 = scmp.ne.s32.totalorder %s79, %s80
      %p91 = scmp.eq.s32.totalorder %s19, 0
      %p92 = por %p90, %p91
      %p93 = scmp.ne.s32.totalorder %s79, %s80
      %p94 = scmp.eq.s32.totalorder %s20, 1
      %p95 = por %p93, %p94
      %p97 = scmp.ne.s32.totalorder %s80, %s96
      %p98 = scmp.eq.s32.totalorder %s20, 0
      %p99 = por %p97, %p98
      %p100 = scmp.le.s32.totalorder 1, %s14
      %p101 = scmp.lt.s32.totalorder %s14, 3
      %p102 = pnand %p100, %p101
      %p103 = pneg %p102
      // Predicated region
      $region9: #{tpu_custom_call.1} parent=5 // pred_check
        _
      $region10: #{tpu_custom_call.1} parent=5 // pred_check_branch
        %105 = sbr.rel (%p102) target = $region12
      $region11: #{tpu_custom_call.1} parent=5 // pred_region
        %s106 = ssub.s32 %s14, 1
      $region12: #{tpu_custom_call.1} parent=5 // pred_fallthru
        _
      %p107 = scmp.lt.s32.totalorder %s14, 2
      // Predicated region
      $region13: #{tpu_custom_call.1} parent=5 // pred_check
        %p108 = pneg %p107
      $region14: #{tpu_custom_call.1} parent=5 // pred_check_branch
        %110 = sbr.rel (%p108) target = $region16
      $region15: #{tpu_custom_call.1} parent=5 // pred_region
        // Predicated region
        $region17: #{tpu_custom_call.1} parent=15 // pred_check
          %p111 = pneg %p34
        $region18: #{tpu_custom_call.1} parent=15 // pred_check_branch
          %113 = sbr.rel (%p111) target = $region20
        $region19: #{tpu_custom_call.1} parent=15 // pred_region
          %s114 = sand.u32 %s24, 1
          %s115 = scalar_lea.sflag [#allocation3], %s114
          %s116 = sand.u32 %s24, 1
          %s117 = smul.addr %s116, 16
          %s118 = scalar_lea.vmem [#allocation2], %s117
          %s119 = smul.u32 2, %s14
          %121 = vsyncadd %s115, 0
          %s122 = smul.addr %s119, 2
          %s123 = smul.addr %s122, 4
          %s124 = scalar_lea.hbm %s0, %s123
          %s125 = sshll.u32 %s124, 4
          %s126 = int_to_ptr.hbm [resolvable:$true] %s125
          %s127 = sshll.u32 %s118, 4
          %s128 = int_to_ptr.vmem [resolvable:$true] %s127
          %133 = dma.hbm_to_vmem [thread:$0]  %s126, 256, %s128, %s115, 128, 128, 8
        $region20: #{tpu_custom_call.1} parent=15 // pred_fallthru
          _
        // Predicated region
        $region21: #{tpu_custom_call.1} parent=15 // pred_check
          %p134 = pneg %p60
        $region22: #{tpu_custom_call.1} parent=15 // pred_check_branch
          %136 = sbr.rel (%p134) target = $region24
        $region23: #{tpu_custom_call.1} parent=15 // pred_region
          %p137 = scmp.lt.s32.totalorder %s14, 1
          %s138 = scalar_select %p137, %s14, 1
          %s139 = smul.addr %s138, 2
          %s140 = smul.addr %s139, 4
          %s141 = scalar_lea.vmem %s1, %s140
        $region24: #{tpu_custom_call.1} parent=15 // pred_fallthru
          _
      $region16: #{tpu_custom_call.1} parent=5 // pred_fallthru
        _
      %p142 = scmp.le.s32.totalorder 1, %s14
      %p143 = scmp.lt.s32.totalorder %s14, 3
      %p144 = pnand %p142, %p143
      %p145 = pneg %p144
      // Predicated region
      $region25: #{tpu_custom_call.1} parent=5 // pred_check
        _
      $region26: #{tpu_custom_call.1} parent=5 // pred_check_branch
        %147 = sbr.rel (%p144) target = $region28
      $region27: #{tpu_custom_call.1} parent=5 // pred_region
        %s148 = ssub.s32 %s14, 1
        %s149 = sand.u32 %s27, 1
        %s150 = scalar_lea.sflag [#allocation3], %s149
        %s151 = sand.u32 %s27, 1
        %s152 = smul.addr %s151, 16
        %s153 = scalar_lea.vmem [#allocation2], %s152
        // Predicated region
        $region29: #{tpu_custom_call.1} parent=27 // pred_check
          %p154 = pneg %p40
        $region30: #{tpu_custom_call.1} parent=27 // pred_check_branch
          %156 = sbr.rel (%p154) target = $region32
        $region31: #{tpu_custom_call.1} parent=27 // pred_region
          %158 = dma.done %s150, 256
        $region32: #{tpu_custom_call.1} parent=27 // pred_fallthru
          _
        %s159 = sand.u32 %s27, 1
        %s160 = scalar_lea.sflag [#allocation3], %s159
        %s161 = sand.u32 %s27, 1
        %s162 = smul.addr %s161, 16
        %s163 = scalar_lea.vmem [#allocation2], %s162
        %p164 = pneg %p40
        %p165 = pneg %p37
        %p166 = scmp.lt.s32.totalorder %s19, 1
        %s167 = scalar_select %p166, %s19, 1
        %s168 = smul.addr %s167, 2
        %s169 = smul.addr %s168, 4
        %s170 = scalar_lea.vmem %s1, %s169
        %p171 = pneg %p66
        %p172 = pneg %p63
        %p173 = pneg %p92
        %p174 = pneg %p89
        %s175 = sand.u32 %s79, 1
        %s176 = scalar_lea.sflag [#allocation4], %s175
        %s177 = sand.u32 %s79, 1
        %s178 = smul.addr %s177, 16
        %s179 = scalar_lea.vmem [#allocation5], %s178
        %s180 = smul.u32 2, %s19
        %p181 = scmp.lt.s32.totalorder %s19, 1
        %s182 = scalar_select %p181, %s19, 1
        %s183 = smul.addr %s182, 2
        %s184 = smul.addr %s183, 4
        %s185 = scalar_lea.vmem %s1, %s184
        %s186 = smul.u32 2, %s19
        %v187 = vld [vmem:[%s153] sm:$0xff]
        %v188 = vld [vmem:[%s153 + $0x8] sm:$0xff]
        %v189 = vld [vmem:[%s185] sm:$0xf]
        %s190 = scalar_lea.vmem %s185, 4
        %v191 = vld [vmem:[%s190] sm:$0xf]
        %194 = vst [vmem:[#allocation1] ss:$2 sm:$0xff] %v187
        %v195 = vld.sshfl [vmem:[#allocation1] sm:$0xff pattern:$0x75316420]
        %v196 = vld.sshfl [vmem:[#allocation1 + $0x8] sm:$0xff pattern:$0x75316420]
        %s197 = scalar_lea.vmem [#allocation1], 16
        %198 = vst [vmem:[%s197] ss:$2 sm:$0xff] %v188
        %v199 = vld.sshfl [vmem:[#allocation1 + $0x10] sm:$0xff pattern:$0x75316420]
        %v200 = vld.sshfl [vmem:[#allocation1 + $0x18] sm:$0xff pattern:$0x75316420]
        %vm205 = vcmask 1043456
        %v206 = vsel %vm205, %v195, 0.0
        %v207 = vsel %vm205, %v196, 0.0
        %v208 = vadd.f32 %v206, %v207
        %209 = vadd.xlane.f32.xlu0 %v208
        %v210 = vpop.xlane.xlu0 %209
        %v211 = vsel %vm205, %v199, 0.0
        %v212 = vsel %vm205, %v200, 0.0
        %v213 = vadd.f32 %v211, %v212
        %214 = vadd.xlane.f32.xlu0 %v213
        %v215 = vpop.xlane.xlu0 %214
        %v216 = vsel %vm205, %v210, 0.0
        %v217 = vsel %vm205, %v215, 0.0
        %v218 = vadd.f32 %v216, %v217
        %v219 = vmul.f32 %v218, 0.001953125
        %v222 = vunpack.c.l.s4 839922192
        %v223 = vunpack.c.0.s8 %v222
        %v224 = vperm.slane %v219, %v223
        %v226 = vsub.f32 %v187, %v224
        %v227 = vsub.f32 %v188, %v224
        %v228 = vmul.f32 %v226, %v226
        %v229 = vmul.f32 %v227, %v227
        %232 = vst [vmem:[#allocation1] ss:$2 sm:$0xff] %v228
        %v233 = vld.sshfl [vmem:[#allocation1] sm:$0xff pattern:$0x75316420]
        %v234 = vld.sshfl [vmem:[#allocation1 + $0x8] sm:$0xff pattern:$0x75316420]
        %s235 = scalar_lea.vmem [#allocation1], 16
        %236 = vst [vmem:[%s235] ss:$2 sm:$0xff] %v229
        %v237 = vld.sshfl [vmem:[#allocation1 + $0x10] sm:$0xff pattern:$0x75316420]
        %v238 = vld.sshfl [vmem:[#allocation1 + $0x18] sm:$0xff pattern:$0x75316420]
        %v243 = vsel %vm205, %v233, 0.0
        %v244 = vsel %vm205, %v234, 0.0
        %v245 = vadd.f32 %v243, %v244
        %246 = vadd.xlane.f32.xlu0 %v245
        %v247 = vpop.xlane.xlu0 %246
        %v248 = vsel %vm205, %v237, 0.0
        %v249 = vsel %vm205, %v238, 0.0
        %v250 = vadd.f32 %v248, %v249
        %251 = vadd.xlane.f32.xlu0 %v250
        %v252 = vpop.xlane.xlu0 %251
        %v253 = vsel %vm205, %v247, 0.0
        %v254 = vsel %vm205, %v252, 0.0
        %v255 = vadd.f32 %v253, %v254
        %v256 = vmul.f32 %v255, 0.001953125
        %v257 = vadd.f32 %v256, 1e-05
        %v258 = vrsqrt.pop %v257
        %v259 = vmul.f32 %v258, %v257
        %v260 = vmul.f32 %v259, %v258
        %v261 = vmul.f32 0.5, %v260
        %v262 = vsub.f32 1.5, %v261
        %v263 = vmul.f32 %v258, %v262
        %vm264 = vweird.f32 %v257
        %vm265 = vweird.f32 %v258
        %vm266 = vmor %vm264, %vm265
        %v267 = vsel %vm266, %v258, %v263
        %v268 = vmul.f32 %v267, %v189
        %270 = vset.pattern.permute.xlu0 0
        %271 = vperm.xlu0 %270, %v268
        %v272 = vpop.permute.xlu0 %271
        %v274 = vunpack.c.l.s4 839922192
        %v275 = vunpack.c.0.s8 %v274
        %v276 = vperm.slane %v272, %v275
        %v278 = vmul.f32 %v226, %v276
        %v279 = vmul.f32 %v227, %v276
        %281 = vset.pattern.permute.xlu0 0
        %282 = vperm.xlu0 %281, %v191
        %v283 = vpop.permute.xlu0 %282
        %v285 = vunpack.c.l.s4 839922192
        %v286 = vunpack.c.0.s8 %v285
        %v287 = vperm.slane %v283, %v286
        %v289 = vadd.f32 %v278, %v287
        %v290 = vadd.f32 %v279, %v287
        %291 = vst [vmem:[%s179] sm:$0xff] %v289
        %292 = vst [vmem:[%s179 + $0x8] sm:$0xff] %v290
        %s293 = sand.u32 %s79, 1
        %s294 = scalar_lea.sflag [#allocation4], %s293
        %s295 = sand.u32 %s79, 1
        %s296 = smul.addr %s295, 16
        %s297 = scalar_lea.vmem [#allocation5], %s296
        // Predicated region
        $region33: #{tpu_custom_call.1} parent=27 // pred_check
          %p298 = pneg %p89
        $region34: #{tpu_custom_call.1} parent=27 // pred_check_branch
          %300 = sbr.rel (%p298) target = $region36
        $region35: #{tpu_custom_call.1} parent=27 // pred_region
          %s301 = smul.u32 2, %s19
          %303 = vsyncadd %s294, 0
          %s304 = smul.addr %s301, 2
          %s305 = smul.addr %s304, 4
          %s306 = scalar_lea.hbm %s2, %s305
          %s307 = sshll.u32 %s297, 4
          %s308 = int_to_ptr.vmem [resolvable:$true] %s307
          %s309 = sshll.u32 %s306, 4
          %s310 = int_to_ptr.hbm [resolvable:$true] %s309
          %315 = dma.vmem_to_hbm [thread:$0]  %s308, 256, %s310, %s294, 128, 128, 8
        $region36: #{tpu_custom_call.1} parent=27 // pred_fallthru
          _
      $region28: #{tpu_custom_call.1} parent=5 // pred_fallthru
        _
      %p316 = scmp.le.s32.totalorder 2, %s14
      // Predicated region
      $region37: #{tpu_custom_call.1} parent=5 // pred_check
        %p317 = pneg %p316
      $region38: #{tpu_custom_call.1} parent=5 // pred_check_branch
        %319 = sbr.rel (%p317) target = $region40
      $region39: #{tpu_custom_call.1} parent=5 // pred_region
        %s320 = ssub.s32 %s14, 2
        // Predicated region
        $region41: #{tpu_custom_call.1} parent=39 // pred_check
          %p321 = pneg %p95
        $region42: #{tpu_custom_call.1} parent=39 // pred_check_branch
          %323 = sbr.rel (%p321) target = $region44
        $region43: #{tpu_custom_call.1} parent=39 // pred_region
          %s324 = sand.u32 %s80, 1
          %s325 = scalar_lea.sflag [#allocation4], %s324
          %s326 = sand.u32 %s80, 1
          %s327 = smul.addr %s326, 16
          %s328 = scalar_lea.vmem [#allocation5], %s327
          %330 = dma.done %s325, 256
        $region44: #{tpu_custom_call.1} parent=39 // pred_fallthru
          _
      $region40: #{tpu_custom_call.1} parent=5 // pred_fallthru
        _
    $region6: #{tpu_custom_call.1} parent=1 // loop_footer
      %s18 = sadd.s32 1, %s14
    $region7: #{tpu_custom_call.1} parent=1 // loop_footer_branch
      %13 = sbr.rel target = $region3
    $region8: #{tpu_custom_call.1} parent=1 // loop_exit
      _
    %331 = vsyncpa [#allocation3], 1
    %s332 = scalar_lea.sflag [#allocation3], 1
    %333 = vsyncpa %s332, 1
    %334 = vsyncpa [#allocation4], 1
    %s335 = scalar_lea.sflag [#allocation4], 1
    %336 = vsyncpa %s335, 1

</llo_original>
